<compile_context>
chip_gen: v7x
topology: tpu7x:2x2x1
jax: 0.10.0
libtpu: 0.0.40
codegen_flags: <defaults>
</compile_context>

<pallas_src>
import jax
import jax.numpy as jnp
from jax.experimental import pallas as pl
from jax.experimental.pallas import tpu as pltpu


def _round_up(x, m):
    return ((x + m - 1) // m) * m


def _dummy_net_kernel(x_ref, w_ref, b_ref, logits_ref, prob_ref):
    # x_ref:  (TB, Dp) streamed input tile (any float dtype, upcast here)
    # w_ref:  (1, Dp)  resident weight row
    # b_ref:  (1, 1)   bias scalar in SMEM
    # logits_ref / prob_ref: (1, TB, 1) output row blocks
    x = x_ref[...].astype(jnp.float32)
    w = w_ref[...].astype(jnp.float32)                 # broadcast over TB rows
    # VPU multiply + XLU lane reduction; no MXU involvement for N == 1.
    logits = jnp.sum(x * w, axis=-1, keepdims=True) + b_ref[0, 0]   # (TB, 1)
    logits_ref[...] = logits[None].astype(logits_ref.dtype)
    # Sigmoid: exp on the EUP, exact divide (keeps 1e-5 parity with reference).
    prob_ref[...] = (1.0 / (1.0 + jnp.exp(-logits)))[None].astype(prob_ref.dtype)


def _dummy_net_forward_impl(x, weight, bias):
    """x: (B, D); weight: (1, D) (PyTorch nn.Linear layout); bias: (1,).

    Returns (logits, prob), each (B, 1) float32.
    """
    B, D = x.shape
    Dp = _round_up(D, 128)                    # lane-dense feature axis

    # Largest batch tile whose single f32 buffer is <= 8 MiB (16 MiB
    # double-buffered) -- safe headroom even for v7x's 64 MiB VMEM.
    per_buffer_bytes = 8 * 1024 * 1024
    tb = min(1024, max(16, per_buffer_bytes // (Dp * 4)))
    tb = min(tb, _round_up(B, 16))
    tb = max(16, (tb // 16) * 16)             # multiple of 16 (bf16-safe sublanes)
    Bp = _round_up(B, tb)
    nt = Bp // tb

    x_p = jnp.pad(x, ((0, Bp - B), (0, Dp - D)))
    w_p = jnp.pad(weight.reshape(1, D).astype(jnp.float32), ((0, 0), (0, Dp - D)))
    b_p = bias.reshape(1, 1).astype(jnp.float32)

    logits_t, prob_t = pl.pallas_call(
        _dummy_net_kernel,
        out_shape=(
            jax.ShapeDtypeStruct((nt, tb, 1), jnp.float32),
            jax.ShapeDtypeStruct((nt, tb, 1), jnp.float32),
        ),
        grid=(nt,),
        in_specs=[
            pl.BlockSpec((tb, Dp), lambda i: (i, 0)),           # streamed x tile
            pl.BlockSpec((1, Dp), lambda i: (0, 0)),            # resident weight
            pl.BlockSpec(memory_space=pltpu.MemorySpace.SMEM),  # bias scalar
        ],
        out_specs=(
            pl.BlockSpec((1, tb, 1), lambda i: (i, 0, 0)),
            pl.BlockSpec((1, tb, 1), lambda i: (i, 0, 0)),
        ),
        compiler_params=pltpu.CompilerParams(
            dimension_semantics=("parallel",),
            vmem_limit_bytes=48 * 1024 * 1024,
        ),
    )(x_p, w_p, b_p)

    logits = logits_t.reshape(Bp, 1)[:B]
    prob = prob_t.reshape(Bp, 1)[:B]
    return logits, prob


dummy_net_forward = jax.jit(_dummy_net_forward_impl)


if __name__ == "__main__":
    B, D = 8, 32  # small batch, dim_in consistent with Linear(dim_in, 1)

    key = jax.random.PRNGKey(0)
    kx, kw, kb = jax.random.split(key, 3)

    x = jax.random.normal(kx, (B, D), dtype=jnp.float32)

    # Deterministic init mimicking torch.nn.Linear's U(-1/sqrt(D), 1/sqrt(D)).
    bound = 1.0 / jnp.sqrt(jnp.float32(D))
    weight = jax.random.uniform(kw, (1, D), minval=-bound, maxval=bound,
                                dtype=jnp.float32)
    bias = jax.random.uniform(kb, (1,), minval=-bound, maxval=bound,
                              dtype=jnp.float32)

    logits, prob = dummy_net_forward(x, weight, bias)
    jax.block_until_ready((logits, prob))

    # Reference in plain JAX (same math as torch: x @ W.T + b, sigmoid).
    ref_logits = x @ weight.T + bias
    ref_prob = jax.nn.sigmoid(ref_logits)
    assert logits.shape == (B, 1) and prob.shape == (B, 1)
    assert jnp.allclose(logits, ref_logits, atol=1e-5, rtol=1e-5)
    assert jnp.allclose(prob, ref_prob, atol=1e-5, rtol=1e-5)

    print("KERNEL_OK")
</pallas_src>

<mosaic_0001>
module attributes {stable_mosaic.version = 11 : i64} {
  func.func @_dummy_net_kernel(%arg0: i32, %arg1: memref<16x128xf32, #tpu.memory_space<vmem>>, %arg2: memref<1x128xf32, #tpu.memory_space<vmem>>, %arg3: memref<1x1xf32, #tpu.memory_space<smem>>, %arg4: memref<1x16x1xf32, #tpu.memory_space<vmem>>, %arg5: memref<1x16x1xf32, #tpu.memory_space<vmem>>) attributes {dimension_semantics = [#tpu.dimension_semantics<parallel>], iteration_bounds = array<i64: 1>, scalar_prefetch = 0 : i64, scratch_operands = 0 : i64, tpu.core_type = #tpu.core_type<tc>, window_params = [{transform_indices = @transform_0, window_bounds = array<i64: 16, 128>}, {pipeline_mode = #tpu.pipeline_mode<synchronous>, transform_indices = @transform_1, window_bounds = array<i64: 1, 128>}, {transform_indices = @transform_2, window_bounds = array<i64: 1, 1>}, {transform_indices = @transform_3, window_bounds = array<i64: 1, 16, 1>}, {transform_indices = @transform_4, window_bounds = array<i64: 1, 16, 1>}]} {
    %c0 = arith.constant 0 : index
    %c0_0 = arith.constant 0 : index
    %0 = vector.load %arg1[%c0, %c0_0] : memref<16x128xf32, #tpu.memory_space<vmem>>, vector<16x128xf32>
    %c0_1 = arith.constant 0 : index
    %c0_2 = arith.constant 0 : index
    %1 = vector.load %arg2[%c0_1, %c0_2] : memref<1x128xf32, #tpu.memory_space<vmem>>, vector<1x128xf32>
    %2 = vector.broadcast %1 : vector<1x128xf32> to vector<16x128xf32>
    %3 = arith.mulf %0, %2 : vector<16x128xf32>
    %cst = arith.constant dense<0.000000e+00> : vector<16xf32>
    %4 = vector.multi_reduction <add>, %3, %cst [1] : vector<16x128xf32> to vector<16xf32>
    %5 = vector.shape_cast %4 : vector<16xf32> to vector<16x1xf32>
    %c0_3 = arith.constant 0 : index
    %c0_4 = arith.constant 0 : index
    %6 = memref.load %arg3[%c0_3, %c0_4] : memref<1x1xf32, #tpu.memory_space<smem>>
    %7 = vector.broadcast %6 : f32 to vector<16x1xf32>
    %8 = arith.addf %5, %7 : vector<16x1xf32>
    %9 = vector.shape_cast %8 : vector<16x1xf32> to vector<1x16x1xf32>
    %c0_5 = arith.constant 0 : index
    %c0_6 = arith.constant 0 : index
    %c0_7 = arith.constant 0 : index
    %10 = vector.load %arg4[%c0_5, %c0_6, %c0_7] : memref<1x16x1xf32, #tpu.memory_space<vmem>>, vector<1x16x1xf32>
    tpu.vector_store %arg4[%c0_5, %c0_6, %c0_7], %9 {strides = array<i32>} : memref<1x16x1xf32, #tpu.memory_space<vmem>>, vector<1x16x1xf32>,
    %cst_8 = arith.constant 0.000000e+00 : f32
    %11 = vector.broadcast %cst_8 : f32 to vector<16x1xf32>
    %12 = arith.subf %11, %8 : vector<16x1xf32>
    %13 = math.exp %12 : vector<16x1xf32>
    %cst_9 = arith.constant 1.000000e+00 : f32
    %14 = vector.broadcast %cst_9 : f32 to vector<16x1xf32>
    %15 = arith.addf %14, %13 : vector<16x1xf32>
    %cst_10 = arith.constant 1.000000e+00 : f32
    %16 = vector.broadcast %cst_10 : f32 to vector<16x1xf32>
    %17 = arith.divf %16, %15 : vector<16x1xf32>
    %18 = vector.shape_cast %17 : vector<16x1xf32> to vector<1x16x1xf32>
    %c0_11 = arith.constant 0 : index
    %c0_12 = arith.constant 0 : index
    %c0_13 = arith.constant 0 : index
    %19 = vector.load %arg5[%c0_11, %c0_12, %c0_13] : memref<1x16x1xf32, #tpu.memory_space<vmem>>, vector<1x16x1xf32>
    tpu.vector_store %arg5[%c0_11, %c0_12, %c0_13], %18 {strides = array<i32>} : memref<1x16x1xf32, #tpu.memory_space<vmem>>, vector<1x16x1xf32>,
    return
  }
  func.func @transform_0(%arg0: i32) -> (i32, i32) {
    %c0_i32 = arith.constant 0 : i32
    %c0_i32_0 = arith.constant 0 : i32
    return %arg0, %c0_i32 : i32, i32
  }
  func.func @transform_1(%arg0: i32) -> (i32, i32) {
    %c0_i32 = arith.constant 0 : i32
    %c0_i32_0 = arith.constant 0 : i32
    %c0_i32_1 = arith.constant 0 : i32
    return %c0_i32, %c0_i32_0 : i32, i32
  }
  func.func @transform_2(%arg0: i32) -> (i32, i32) {
    %c0_i32 = arith.constant 0 : i32
    %c0_i32_0 = arith.constant 0 : i32
    %c0_i32_1 = arith.constant 0 : i32
    return %c0_i32, %c0_i32_0 : i32, i32
  }
  func.func @transform_3(%arg0: i32) -> (i32, i32, i32) {
    %c0_i32 = arith.constant 0 : i32
    %c0_i32_0 = arith.constant 0 : i32
    %c0_i32_1 = arith.constant 0 : i32
    return %arg0, %c0_i32, %c0_i32_0 : i32, i32, i32
  }
  func.func @transform_4(%arg0: i32) -> (i32, i32, i32) {
    %c0_i32 = arith.constant 0 : i32
    %c0_i32_0 = arith.constant 0 : i32
    %c0_i32_1 = arith.constant 0 : i32
    return %arg0, %c0_i32, %c0_i32_0 : i32, i32, i32
  }
}

</mosaic_0001>

<llo_original>
// kernel: _dummy_net_forward_impl.1
$region0: #{_dummy_net_forward_impl.1}
  #allocation0 [shape = 'u32[]', space=smem, size = 0x4, offset = 0x4, fixed_abs, tag = 'smem constant byte address 0x4 - core index']
  #allocation1 [shape = 'u32[144,128]{1,0:T(1,128)}', space=vmem, size = 0x12000, scoped, tag = 'internal scratch']
  #allocation2 [shape = 'f32[1,1]{1,0:T(1,128)S(6)}', space=smem, size = 0x200, scoped, tag = 'scoped memory for _dummy_net_forward_impl.1']
  %s0 = inlined_call_operand.vmem [shape: f32[16,128], index: 0, kind: input, shape index: {}]
  %s1 = inlined_call_operand.vmem [shape: f32[1,128], index: 1, kind: input, shape index: {}]
  %s2 = inlined_call_operand.<no memory space> [shape: f32[1,1], index: 2, kind: input, shape index: {}]
  %s3 = inlined_call_operand.vmem [shape: f32[1,16,1], index: 3, kind: output, shape index: {0}]
  %s4 = inlined_call_operand.vmem [shape: f32[1,16,1], index: 4, kind: output, shape index: {1}]
  %5 = xla_tuple %s3, %s4
  %s6 = sld [smem:[#allocation0]]
  $region30: #{_dummy_net_forward_impl.1} parent=0
    _
  %s8 = ssub.s32 1, %s6
  %s9 = scalar_select 0, %s8, %s6
  %10 = sst [smem:[#allocation2]] %s2
  // Predicated region
  $region2: #{_dummy_net_forward_impl.1} parent=0 // pred_check
    _
  $region3: #{_dummy_net_forward_impl.1} parent=0 // pred_check_branch
    %12 = sbr.rel (0) target = $region5
  $region4: #{_dummy_net_forward_impl.1} parent=0 // pred_region
    _
  $region5: #{_dummy_net_forward_impl.1} parent=0 // pred_fallthru
    _
  // Predicated region
  $region6: #{_dummy_net_forward_impl.1} parent=0 // pred_check
    _
  $region7: #{_dummy_net_forward_impl.1} parent=0 // pred_check_branch
    %14 = sbr.rel (0) target = $region9
  $region8: #{_dummy_net_forward_impl.1} parent=0 // pred_region
    _
  $region9: #{_dummy_net_forward_impl.1} parent=0 // pred_fallthru
    _
  // Predicated region
  $region10: #{_dummy_net_forward_impl.1} parent=0 // pred_check
    _
  $region11: #{_dummy_net_forward_impl.1} parent=0 // pred_check_branch
    %16 = sbr.rel (0) target = $region13
  $region12: #{_dummy_net_forward_impl.1} parent=0 // pred_region
    _
  $region13: #{_dummy_net_forward_impl.1} parent=0 // pred_fallthru
    _
  %v17 = vld [vmem:[%s0] sm:$0xff]
  %v18 = vld [vmem:[%s0 + $0x8] sm:$0xff]
  %v19 = vld [vmem:[%s1] sm:$0x1]
  %v21 = vlaneseq
  %v22 = vshrl.u32 %v21, 7
  %v23 = vsub.s32 0, %v22
  %v24 = vrot.slane %v19, %v23
  %v26 = vmul.f32 %v17, %v24
  %v27 = vmul.f32 %v18, %v24
  %28 = vadd.xlane.f32.xlu0 %v26
  %v29 = vpop.xlane.xlu0 %28
  %30 = vadd.xlane.f32.xlu0 %v27
  %v31 = vpop.xlane.xlu0 %30
  %s32 = sld [smem:[#allocation2]]
  %v33 = vstv %s32
  %v34 = vadd.f32 %v29, %v33
  %v35 = vadd.f32 %v31, %v33
  %vm36 = vcmask 7168
  %37 = vst.msk [vmem:[%s3] sm:$0xff] %vm36, %v34
  %38 = vst.msk [vmem:[%s3 + $0x8] sm:$0xff] %vm36, %v35
  %v39 = vsub.f32 0.0, %v34
  %v40 = vsub.f32 0.0, %v35
  %v41 = vmul.f32 %v39, 1.442695
  %v42 = vpow.pop %v41
  %v43 = vmul.f32 %v40, 1.442695
  %v44 = vpow.pop %v43
  %v45 = vadd.f32 %v42, 1.0
  %v46 = vadd.f32 %v44, 1.0
  %v47 = vrcp.pop %v45
  %v48 = vmul.f32 1.0, %v47
  %v49 = vrcp.pop %v46
  %v50 = vmul.f32 1.0, %v49
  %51 = vst.msk [vmem:[%s4] sm:$0xff] %vm36, %v48
  %52 = vst.msk [vmem:[%s4 + $0x8] sm:$0xff] %vm36, %v50
  // Predicated region
  $region14: #{_dummy_net_forward_impl.1} parent=0 // pred_check
    _
  $region15: #{_dummy_net_forward_impl.1} parent=0 // pred_check_branch
    %54 = sbr.rel (0) target = $region17
  $region16: #{_dummy_net_forward_impl.1} parent=0 // pred_region
    _
  $region17: #{_dummy_net_forward_impl.1} parent=0 // pred_fallthru
    _
  // Predicated region
  $region18: #{_dummy_net_forward_impl.1} parent=0 // pred_check
    _
  $region19: #{_dummy_net_forward_impl.1} parent=0 // pred_check_branch
    %56 = sbr.rel (0) target = $region21
  $region20: #{_dummy_net_forward_impl.1} parent=0 // pred_region
    _
  $region21: #{_dummy_net_forward_impl.1} parent=0 // pred_fallthru
    _
  // Predicated region
  $region22: #{_dummy_net_forward_impl.1} parent=0 // pred_check
    _
  $region23: #{_dummy_net_forward_impl.1} parent=0 // pred_check_branch
    %58 = sbr.rel (0) target = $region25
  $region24: #{_dummy_net_forward_impl.1} parent=0 // pred_region
    _
  $region25: #{_dummy_net_forward_impl.1} parent=0 // pred_fallthru
    _
  // Predicated region
  $region26: #{_dummy_net_forward_impl.1} parent=0 // pred_check
    _
  $region27: #{_dummy_net_forward_impl.1} parent=0 // pred_check_branch
    %60 = sbr.rel (0) target = $region29
  $region28: #{_dummy_net_forward_impl.1} parent=0 // pred_region
    _
  $region29: #{_dummy_net_forward_impl.1} parent=0 // pred_fallthru
    _

</llo_original>
